<compile_context>
chip_gen: v5e
topology: v5e:2x2
jax: 0.10.0
libtpu: 0.0.40
codegen_flags: <defaults>
</compile_context>

<pallas_src>
import functools

import jax
import jax.numpy as jnp
from jax.experimental import pallas as pl
from jax.experimental.pallas import tpu as pltpu


def _lse_kernel(x_ref, wt_ref, b_ref, lse_ref, m_sc, l_sc):
    # x_ref : (TM, d_model)  bf16/f32   (resident across the vocab axis)
    # wt_ref: (d_model, TV)  bf16/f32   (streams over vocab tiles)
    # b_ref : (1, TV)        f32
    # lse_ref: (TM, 1)       f32 output (written at the last vocab tile)
    # m_sc, l_sc: (TM, 1)    f32 scratch (running max / running sum-exp)
    j = pl.program_id(1)

    @pl.when(j == 0)
    def _():
        m_sc[...] = jnp.full_like(m_sc, -jnp.inf)
        l_sc[...] = jnp.zeros_like(l_sc)

    logits = jnp.dot(x_ref[...], wt_ref[...], preferred_element_type=jnp.float32)
    logits = logits + b_ref[...]  # f32 bias, broadcast over rows

    m_prev = m_sc[...]
    m_new = jnp.maximum(m_prev, jnp.max(logits, axis=-1, keepdims=True))
    alpha = jnp.exp(m_prev - m_new)
    l_sc[...] = alpha * l_sc[...] + jnp.sum(jnp.exp(logits - m_new), axis=-1, keepdims=True)
    m_sc[...] = m_new

    @pl.when(j == pl.num_programs(1) - 1)
    def _():
        lse_ref[...] = m_sc[...] + jnp.log(l_sc[...])


def _normalize_kernel(x_ref, wt_ref, b_ref, lse_ref, o_ref):
    # Recompute this (row, vocab) tile of logits and subtract the precomputed row LSE.
    logits = jnp.dot(x_ref[...], wt_ref[...], preferred_element_type=jnp.float32)
    logits = logits + b_ref[...]
    o_ref[...] = (logits - lse_ref[...]).astype(o_ref.dtype)


def _round_up(x, m):
    return ((x + m - 1) // m) * m


@functools.partial(jax.jit, static_argnames=("block_rows", "block_vocab", "use_bf16"))
def projection_layer_forward(x, w, b, *, block_rows=128, block_vocab=2048, use_bf16=True):
    """x: (N, d_model), w: (vocab, d_model) [nn.Linear layout], b: (vocab,) -> (N, vocab) log-probs."""
    n, d_model = x.shape
    vocab = w.shape[0]
    out_dtype = x.dtype

    row_align = 16 if use_bf16 else 8
    tm = min(block_rows, _round_up(n, row_align))      # row tile (multiple of 8/16 sublanes)
    tv = min(block_vocab, _round_up(vocab, 128))       # vocab tile (multiple of 128 lanes)
    n_pad = _round_up(n, tm)
    v_pad = _round_up(vocab, tv)

    mm_dtype = jnp.bfloat16 if use_bf16 else x.dtype
    xk = x.astype(mm_dtype)
    wt = w.T.astype(mm_dtype)            # (d_model, vocab), pre-transposed once
    bk = b.astype(jnp.float32)           # bias kept f32, cast hoisted out of the kernel

    if n_pad != n:
        xk = jnp.pad(xk, ((0, n_pad - n), (0, 0)))
    if v_pad != vocab:
        wt = jnp.pad(wt, ((0, 0), (0, v_pad - vocab)))
        # padded vocab columns get a huge negative bias -> exp underflows to 0, no LSE effect
        bk = jnp.pad(bk, (0, v_pad - vocab), constant_values=-1e30)
    b2d = bk.reshape(1, v_pad)

    grid = (n_pad // tm, v_pad // tv)
    vmem_limit = 48 * 1024 * 1024  # safe across v5e/v6e (128 MiB) and v7x (64 MiB) VMEM

    # Pass 1: per-row log-sum-exp over streamed vocab tiles (online max / lse).
    lse = pl.pallas_call(
        _lse_kernel,
        out_shape=jax.ShapeDtypeStruct((n_pad, 1), jnp.float32),
        grid=grid,
        in_specs=[
            pl.BlockSpec((tm, d_model), lambda i, j: (i, 0)),
            pl.BlockSpec((d_model, tv), lambda i, j: (0, j)),
            pl.BlockSpec((1, tv), lambda i, j: (0, j)),
        ],
        out_specs=pl.BlockSpec((tm, 1), lambda i, j: (i, 0)),
        scratch_shapes=[
            pltpu.VMEM((tm, 1), jnp.float32),
            pltpu.VMEM((tm, 1), jnp.float32),
        ],
        compiler_params=pltpu.CompilerParams(
            dimension_semantics=("parallel", "arbitrary"),
            vmem_limit_bytes=vmem_limit,
        ),
    )(xk, wt, b2d)

    # Pass 2: recompute logits per tile and write lane-dense (TM, TV) output blocks.
    out_padded = pl.pallas_call(
        _normalize_kernel,
        out_shape=jax.ShapeDtypeStruct((n_pad, v_pad), out_dtype),
        grid=grid,
        in_specs=[
            pl.BlockSpec((tm, d_model), lambda i, j: (i, 0)),
            pl.BlockSpec((d_model, tv), lambda i, j: (0, j)),
            pl.BlockSpec((1, tv), lambda i, j: (0, j)),
            pl.BlockSpec((tm, 1), lambda i, j: (i, 0)),
        ],
        out_specs=pl.BlockSpec((tm, tv), lambda i, j: (i, j)),
        compiler_params=pltpu.CompilerParams(
            dimension_semantics=("parallel", "parallel"),
            vmem_limit_bytes=vmem_limit,
        ),
    )(xk, wt, b2d, lse)

    return out_padded[:n, :vocab]


def _reference(x, w, b, use_bf16=True):
    if use_bf16:
        x = x.astype(jnp.bfloat16).astype(jnp.float32)
        w = w.astype(jnp.bfloat16).astype(jnp.float32)
    logits = x @ w.T + b
    return jax.nn.log_softmax(logits, axis=-1)


if __name__ == "__main__":
    d_model = 32
    vocab_size = 200          # deliberately not a multiple of 128 -> exercises vocab padding
    batch, seq = 2, 8
    n_tokens = batch * seq    # 16 rows

    key = jax.random.PRNGKey(0)
    kx, kw, kb = jax.random.split(key, 3)

    # nn.Linear-style uniform(-1/sqrt(d_model), 1/sqrt(d_model)) init
    bound = 1.0 / (d_model ** 0.5)
    w = jax.random.uniform(kw, (vocab_size, d_model), jnp.float32, -bound, bound)
    b = jax.random.uniform(kb, (vocab_size,), jnp.float32, -bound, bound)
    x = jax.random.normal(kx, (n_tokens, d_model), jnp.float32)

    # block_vocab=128 at this toy vocab -> 2 vocab tiles, exercising the online LSE path.
    out = projection_layer_forward(x, w, b, block_rows=128, block_vocab=128, use_bf16=True)
    out = jax.block_until_ready(out)

    ref = _reference(x, w, b, use_bf16=True)
    assert out.shape == (n_tokens, vocab_size)
    assert bool(jnp.isfinite(out).all()), "non-finite output"
    max_err = float(jnp.max(jnp.abs(out - ref)))
    assert jnp.allclose(out, ref, atol=1e-3, rtol=1e-3), f"mismatch vs reference (max_err={max_err})"

    print("KERNEL_OK")
</pallas_src>

<mosaic_0001>
module attributes {stable_mosaic.version = 11 : i64} {
  func.func @_normalize_kernel(%arg0: i32, %arg1: i32, %arg2: memref<16x32xbf16, #tpu.memory_space<vmem>>, %arg3: memref<32x128xbf16, #tpu.memory_space<vmem>>, %arg4: memref<1x128xf32, #tpu.memory_space<vmem>>, %arg5: memref<16x1xf32, #tpu.memory_space<vmem>>, %arg6: memref<16x128xf32, #tpu.memory_space<vmem>>) attributes {dimension_semantics = [#tpu.dimension_semantics<parallel>, #tpu.dimension_semantics<parallel>], iteration_bounds = array<i64: 1, 2>, scalar_prefetch = 0 : i64, scratch_operands = 0 : i64, tpu.core_type = #tpu.core_type<tc>, window_params = [{transform_indices = @transform_0, window_bounds = array<i64: 16, 32>}, {transform_indices = @transform_1, window_bounds = array<i64: 32, 128>}, {transform_indices = @transform_2, window_bounds = array<i64: 1, 128>}, {transform_indices = @transform_3, window_bounds = array<i64: 16, 1>}, {transform_indices = @transform_4, window_bounds = array<i64: 16, 128>}]} {
    %c0 = arith.constant 0 : index
    %c0_0 = arith.constant 0 : index
    %0 = vector.load %arg2[%c0, %c0_0] : memref<16x32xbf16, #tpu.memory_space<vmem>>, vector<16x32xbf16>
    %c0_1 = arith.constant 0 : index
    %c0_2 = arith.constant 0 : index
    %1 = vector.load %arg3[%c0_1, %c0_2] : memref<32x128xbf16, #tpu.memory_space<vmem>>, vector<32x128xbf16>
    %cst = arith.constant dense<0.000000e+00> : vector<16x128xf32>
    %2 = tpu.matmul %0, %1, %cst {dimension_numbers = #tpu.dot_dimension_numbers<[1], [0], [0], [1], [0, 0, 1, 1], [], []>} : vector<16x32xbf16>, vector<32x128xbf16>, vector<16x128xf32> -> vector<16x128xf32>
    %c0_3 = arith.constant 0 : index
    %c0_4 = arith.constant 0 : index
    %3 = vector.load %arg4[%c0_3, %c0_4] : memref<1x128xf32, #tpu.memory_space<vmem>>, vector<1x128xf32>
    %4 = vector.broadcast %3 : vector<1x128xf32> to vector<16x128xf32>
    %5 = arith.addf %2, %4 : vector<16x128xf32>
    %c0_5 = arith.constant 0 : index
    %c0_6 = arith.constant 0 : index
    %6 = vector.load %arg5[%c0_5, %c0_6] : memref<16x1xf32, #tpu.memory_space<vmem>>, vector<16x1xf32>
    %7 = vector.broadcast %6 : vector<16x1xf32> to vector<16x128xf32>
    %8 = arith.subf %5, %7 : vector<16x128xf32>
    %c0_7 = arith.constant 0 : index
    %c0_8 = arith.constant 0 : index
    %9 = vector.load %arg6[%c0_7, %c0_8] : memref<16x128xf32, #tpu.memory_space<vmem>>, vector<16x128xf32>
    tpu.vector_store %arg6[%c0_7, %c0_8], %8 {strides = array<i32>} : memref<16x128xf32, #tpu.memory_space<vmem>>, vector<16x128xf32>,
    return
  }
  func.func @transform_0(%arg0: i32, %arg1: i32) -> (i32, i32) {
    %c0_i32 = arith.constant 0 : i32
    %c0_i32_0 = arith.constant 0 : i32
    return %arg0, %c0_i32 : i32, i32
  }
  func.func @transform_1(%arg0: i32, %arg1: i32) -> (i32, i32) {
    %c0_i32 = arith.constant 0 : i32
    %c0_i32_0 = arith.constant 0 : i32
    return %c0_i32, %arg1 : i32, i32
  }
  func.func @transform_2(%arg0: i32, %arg1: i32) -> (i32, i32) {
    %c0_i32 = arith.constant 0 : i32
    %c0_i32_0 = arith.constant 0 : i32
    return %c0_i32, %arg1 : i32, i32
  }
  func.func @transform_3(%arg0: i32, %arg1: i32) -> (i32, i32) {
    %c0_i32 = arith.constant 0 : i32
    %c0_i32_0 = arith.constant 0 : i32
    return %arg0, %c0_i32 : i32, i32
  }
  func.func @transform_4(%arg0: i32, %arg1: i32) -> (i32, i32) {
    %c0_i32 = arith.constant 0 : i32
    return %arg0, %arg1 : i32, i32
  }
}

module attributes {stable_mosaic.version = 11 : i64} {
  func.func @_lse_kernel(%arg0: i32, %arg1: i32, %arg2: memref<16x32xbf16, #tpu.memory_space<vmem>>, %arg3: memref<32x128xbf16, #tpu.memory_space<vmem>>, %arg4: memref<1x128xf32, #tpu.memory_space<vmem>>, %arg5: memref<16x1xf32, #tpu.memory_space<vmem>>, %arg6: memref<16x1xf32, #tpu.memory_space<vmem>>, %arg7: memref<16x1xf32, #tpu.memory_space<vmem>>) attributes {dimension_semantics = [#tpu.dimension_semantics<parallel>, #tpu.dimension_semantics<arbitrary>], iteration_bounds = array<i64: 1, 2>, scalar_prefetch = 0 : i64, scratch_operands = 2 : i64, tpu.core_type = #tpu.core_type<tc>, window_params = [{transform_indices = @transform_0, window_bounds = array<i64: 16, 32>}, {transform_indices = @transform_1, window_bounds = array<i64: 32, 128>}, {transform_indices = @transform_2, window_bounds = array<i64: 1, 128>}, {transform_indices = @transform_3, window_bounds = array<i64: 16, 1>}]} {
    %c0_i32 = arith.constant 0 : i32
    %0 = arith.cmpi eq, %arg1, %c0_i32 : i32
    %1 = arith.extui %0 : i1 to i32
    %c0_i32_0 = arith.constant 0 : i32
    %2 = arith.cmpi ne, %1, %c0_i32_0 : i32
    scf.if %2 {
      %cst_17 = arith.constant 0xFF800000 : f32
      %28 = vector.broadcast %cst_17 : f32 to vector<16x1xf32>
      %c0_18 = arith.constant 0 : index
      %c0_19 = arith.constant 0 : index
      %29 = vector.load %arg6[%c0_18, %c0_19] : memref<16x1xf32, #tpu.memory_space<vmem>>, vector<16x1xf32>
      tpu.vector_store %arg6[%c0_18, %c0_19], %28 {strides = array<i32>} : memref<16x1xf32, #tpu.memory_space<vmem>>, vector<16x1xf32>,
      %cst_20 = arith.constant 0.000000e+00 : f32
      %30 = vector.broadcast %cst_20 : f32 to vector<16x1xf32>
      %c0_21 = arith.constant 0 : index
      %c0_22 = arith.constant 0 : index
      %31 = vector.load %arg7[%c0_21, %c0_22] : memref<16x1xf32, #tpu.memory_space<vmem>>, vector<16x1xf32>
      tpu.vector_store %arg7[%c0_21, %c0_22], %30 {strides = array<i32>} : memref<16x1xf32, #tpu.memory_space<vmem>>, vector<16x1xf32>,
    } else {
    }
    %c0 = arith.constant 0 : index
    %c0_1 = arith.constant 0 : index
    %3 = vector.load %arg2[%c0, %c0_1] : memref<16x32xbf16, #tpu.memory_space<vmem>>, vector<16x32xbf16>
    %c0_2 = arith.constant 0 : index
    %c0_3 = arith.constant 0 : index
    %4 = vector.load %arg3[%c0_2, %c0_3] : memref<32x128xbf16, #tpu.memory_space<vmem>>, vector<32x128xbf16>
    %cst = arith.constant dense<0.000000e+00> : vector<16x128xf32>
    %5 = tpu.matmul %3, %4, %cst {dimension_numbers = #tpu.dot_dimension_numbers<[1], [0], [0], [1], [0, 0, 1, 1], [], []>} : vector<16x32xbf16>, vector<32x128xbf16>, vector<16x128xf32> -> vector<16x128xf32>
    %c0_4 = arith.constant 0 : index
    %c0_5 = arith.constant 0 : index
    %6 = vector.load %arg4[%c0_4, %c0_5] : memref<1x128xf32, #tpu.memory_space<vmem>>, vector<1x128xf32>
    %7 = vector.broadcast %6 : vector<1x128xf32> to vector<16x128xf32>
    %8 = arith.addf %5, %7 : vector<16x128xf32>
    %c0_6 = arith.constant 0 : index
    %c0_7 = arith.constant 0 : index
    %9 = vector.load %arg6[%c0_6, %c0_7] : memref<16x1xf32, #tpu.memory_space<vmem>>, vector<16x1xf32>
    %cst_8 = arith.constant dense<0xFF800000> : vector<16xf32>
    %10 = vector.multi_reduction <maximumf>, %8, %cst_8 [1] : vector<16x128xf32> to vector<16xf32>
    %11 = vector.shape_cast %10 : vector<16xf32> to vector<16x1xf32>
    %12 = arith.maximumf %9, %11 : vector<16x1xf32>
    %13 = arith.subf %9, %12 : vector<16x1xf32>
    %14 = math.exp %13 : vector<16x1xf32>
    %c0_9 = arith.constant 0 : index
    %c0_10 = arith.constant 0 : index
    %15 = vector.load %arg7[%c0_9, %c0_10] : memref<16x1xf32, #tpu.memory_space<vmem>>, vector<16x1xf32>
    %16 = arith.mulf %14, %15 : vector<16x1xf32>
    %17 = vector.broadcast %12 : vector<16x1xf32> to vector<16x128xf32>
    %18 = arith.subf %8, %17 : vector<16x128xf32>
    %19 = math.exp %18 : vector<16x128xf32>
    %cst_11 = arith.constant dense<0.000000e+00> : vector<16xf32>
    %20 = vector.multi_reduction <add>, %19, %cst_11 [1] : vector<16x128xf32> to vector<16xf32>
    %21 = vector.shape_cast %20 : vector<16xf32> to vector<16x1xf32>
    %22 = arith.addf %16, %21 : vector<16x1xf32>
    %c0_12 = arith.constant 0 : index
    %c0_13 = arith.constant 0 : index
    %23 = vector.load %arg7[%c0_12, %c0_13] : memref<16x1xf32, #tpu.memory_space<vmem>>, vector<16x1xf32>
    tpu.vector_store %arg7[%c0_12, %c0_13], %22 {strides = array<i32>} : memref<16x1xf32, #tpu.memory_space<vmem>>, vector<16x1xf32>,
    %c0_14 = arith.constant 0 : index
    %c0_15 = arith.constant 0 : index
    %24 = vector.load %arg6[%c0_14, %c0_15] : memref<16x1xf32, #tpu.memory_space<vmem>>, vector<16x1xf32>
    tpu.vector_store %arg6[%c0_14, %c0_15], %12 {strides = array<i32>} : memref<16x1xf32, #tpu.memory_space<vmem>>, vector<16x1xf32>,
    %c1_i32 = arith.constant 1 : i32
    %25 = arith.cmpi eq, %arg1, %c1_i32 : i32
    %26 = arith.extui %25 : i1 to i32
    %c0_i32_16 = arith.constant 0 : i32
    %27 = arith.cmpi ne, %26, %c0_i32_16 : i32
    scf.if %27 {
      %c0_17 = arith.constant 0 : index
      %c0_18 = arith.constant 0 : index
      %28 = vector.load %arg6[%c0_17, %c0_18] : memref<16x1xf32, #tpu.memory_space<vmem>>, vector<16x1xf32>
      %c0_19 = arith.constant 0 : index
      %c0_20 = arith.constant 0 : index
      %29 = vector.load %arg7[%c0_19, %c0_20] : memref<16x1xf32, #tpu.memory_space<vmem>>, vector<16x1xf32>
      %30 = math.log %29 : vector<16x1xf32>
      %31 = arith.addf %28, %30 : vector<16x1xf32>
      %c0_21 = arith.constant 0 : index
      %c0_22 = arith.constant 0 : index
      %32 = vector.load %arg5[%c0_21, %c0_22] : memref<16x1xf32, #tpu.memory_space<vmem>>, vector<16x1xf32>
      tpu.vector_store %arg5[%c0_21, %c0_22], %31 {strides = array<i32>} : memref<16x1xf32, #tpu.memory_space<vmem>>, vector<16x1xf32>,
    } else {
    }
    return
  }
  func.func @transform_0(%arg0: i32, %arg1: i32) -> (i32, i32) {
    %c0_i32 = arith.constant 0 : i32
    %c0_i32_0 = arith.constant 0 : i32
    return %arg0, %c0_i32 : i32, i32
  }
  func.func @transform_1(%arg0: i32, %arg1: i32) -> (i32, i32) {
    %c0_i32 = arith.constant 0 : i32
    %c0_i32_0 = arith.constant 0 : i32
    return %c0_i32, %arg1 : i32, i32
  }
  func.func @transform_2(%arg0: i32, %arg1: i32) -> (i32, i32) {
    %c0_i32 = arith.constant 0 : i32
    %c0_i32_0 = arith.constant 0 : i32
    return %c0_i32, %arg1 : i32, i32
  }
  func.func @transform_3(%arg0: i32, %arg1: i32) -> (i32, i32) {
    %c0_i32 = arith.constant 0 : i32
    %c0_i32_0 = arith.constant 0 : i32
    return %arg0, %c0_i32 : i32, i32
  }
}

</mosaic_0001>

<llo_original>
// kernel: projection_layer_forward.3
$region0: #{projection_layer_forward.3}
  #allocation0 [shape = 'u32[]', space=smem, size = 0x4, offset = 0x4, fixed_abs, tag = 'smem constant byte address 0x4 - core index']
  #allocation1 [shape = 'u32[72,128]{1,0:T(1,128)}', space=vmem, size = 0x9000, scoped, tag = 'internal scratch']
  %s0 = inlined_call_operand.vmem [shape: bf16[16,32], index: 0, kind: input, shape index: {}]
  %s1 = inlined_call_operand.vmem [shape: bf16[32,256], index: 1, kind: input, shape index: {}]
  %s2 = inlined_call_operand.vmem [shape: f32[1,256], index: 2, kind: input, shape index: {}]
  %s3 = inlined_call_operand.vmem [shape: f32[16,1], index: 3, kind: input, shape index: {}]
  %s4 = inlined_call_operand.hbm [shape: f32[16,256], index: 4, kind: output, shape index: {}]
  %s5 = sld [smem:[#allocation0]]
  $region90: #{projection_layer_forward.3} parent=0
    _
  %s7 = ssub.s32 1, %s5
  %s8 = scalar_select 0, %s7, %s5
  $region1: #{projection_layer_forward.3} parent=0
    #allocation2 [shape = 'u8[16384]{0}', space=vmem, size = 0x4000, scoped, tag = 'input window, operand 1']
    #allocation3 [shape = 'u8[16384]{0}', space=vmem, size = 0x4000, scoped, tag = 'output window, operand 0']
    #allocation4 [shape = 's32[2]{0}', space=sflag, size = 0x8, scoped, tag = 'scoped memory for projection_layer_forward.3']
    %9 = vsyncpa [#allocation4], 0
    %s10 = scalar_lea.sflag [#allocation4], 1
    %11 = vsyncpa %s10, 0
    loop: start=0, step=1, limit=4
    $region2: #{projection_layer_forward.3} parent=1 // loop_pre_header
      _
    $region3: #{projection_layer_forward.3} parent=1 // loop_header
      %s13 = sphi 0, %s17
      %p14 = scmp.ge.s32.totalorder %s13, 4
      %s20 = sphi 0, %s32
      %s21 = sphi 0, %s28
      %s22 = sphi 0, %s20
      %s23 = sphi 0, %s21
      %s24 = sphi 0, %s22
      %s25 = sphi 0, %s23
      %s35 = sphi 0, %s37
      %s38 = sphi 0, %s35
      %s39 = sphi 0, %s38
      %s55 = sphi 0, %s39
      %s61 = sphi 0, %s63
      %s64 = sphi 0, %s61
      %s65 = sphi 0, %s64
      %s81 = sphi 0, %s65
      %s87 = sphi 0, %s89
      %s90 = sphi 0, %s87
      %s91 = sphi 0, %s90
      %s107 = sphi 0, %s91
      %s113 = sphi 0, %s115
      %s116 = sphi 0, %s113
      %s117 = sphi 0, %s116
      %s133 = sphi 0, %s117
      %s141 = sphi 0, %s143
      %s144 = sphi 0, %s141
      %s145 = sphi 0, %s144
      %s161 = sphi 0, %s145
    $region4: #{projection_layer_forward.3} parent=1 // loop_header_branch
      %16 = sbr.rel (%p14) target = $region8
    $region5: #{projection_layer_forward.3} parent=1 // loop_body
      %s18 = ssub.s32 %s13, 1
      %s19 = ssub.s32 %s13, 2
      %s26 = sadd.s32 1, %s21
      %p27 = scmp.ge.s32.totalorder %s26, 2
      %s28 = scalar_select %p27, 0, %s26
      %s29 = sadd.s32 1, %s20
      %s30 = scalar_select %p27, %s29, %s20
      %p31 = scmp.ge.s32.totalorder %s30, 1
      %s32 = scalar_select %p31, 0, %s30
      %s33 = ssub.s32 %s20, %s32
      %p34 = scmp.eq.s32.totalorder %s33, 0
      %s36 = sadd.s32 %s35, 1
      %s37 = scalar_select %p34, %s35, %s36
      %p40 = pneg %p34
      %p41 = scmp.eq.s32.totalorder %s13, 1
      %p42 = por %p40, %p41
      %p43 = scmp.ne.s32.totalorder %s35, %s38
      %p44 = scmp.eq.s32.totalorder %s13, 0
      %p45 = por %p43, %p44
      %p46 = scmp.ne.s32.totalorder %s35, %s38
      %p47 = scmp.eq.s32.totalorder %s18, 1
      %p48 = por %p46, %p47
      %p49 = scmp.ne.s32.totalorder %s38, %s39
      %p50 = scmp.eq.s32.totalorder %s18, 0
      %p51 = por %p49, %p50
      %p52 = scmp.ne.s32.totalorder %s38, %s39
      %p53 = scmp.eq.s32.totalorder %s19, 1
      %p54 = por %p52, %p53
      %p56 = scmp.ne.s32.totalorder %s39, %s55
      %p57 = scmp.eq.s32.totalorder %s19, 0
      %p58 = por %p56, %p57
      %s59 = ssub.s32 %s21, %s28
      %p60 = scmp.eq.s32.totalorder %s59, 0
      %s62 = sadd.s32 %s61, 1
      %s63 = scalar_select %p60, %s61, %s62
      %p66 = pneg %p60
      %p67 = scmp.eq.s32.totalorder %s13, 1
      %p68 = por %p66, %p67
      %p69 = scmp.ne.s32.totalorder %s61, %s64
      %p70 = scmp.eq.s32.totalorder %s13, 0
      %p71 = por %p69, %p70
      %p72 = scmp.ne.s32.totalorder %s61, %s64
      %p73 = scmp.eq.s32.totalorder %s18, 1
      %p74 = por %p72, %p73
      %p75 = scmp.ne.s32.totalorder %s64, %s65
      %p76 = scmp.eq.s32.totalorder %s18, 0
      %p77 = por %p75, %p76
      %p78 = scmp.ne.s32.totalorder %s64, %s65
      %p79 = scmp.eq.s32.totalorder %s19, 1
      %p80 = por %p78, %p79
      %p82 = scmp.ne.s32.totalorder %s65, %s81
      %p83 = scmp.eq.s32.totalorder %s19, 0
      %p84 = por %p82, %p83
      %s85 = ssub.s32 %s21, %s28
      %p86 = scmp.eq.s32.totalorder %s85, 0
      %s88 = sadd.s32 %s87, 1
      %s89 = scalar_select %p86, %s87, %s88
      %p92 = pneg %p86
      %p93 = scmp.eq.s32.totalorder %s13, 1
      %p94 = por %p92, %p93
      %p95 = scmp.ne.s32.totalorder %s87, %s90
      %p96 = scmp.eq.s32.totalorder %s13, 0
      %p97 = por %p95, %p96
      %p98 = scmp.ne.s32.totalorder %s87, %s90
      %p99 = scmp.eq.s32.totalorder %s18, 1
      %p100 = por %p98, %p99
      %p101 = scmp.ne.s32.totalorder %s90, %s91
      %p102 = scmp.eq.s32.totalorder %s18, 0
      %p103 = por %p101, %p102
      %p104 = scmp.ne.s32.totalorder %s90, %s91
      %p105 = scmp.eq.s32.totalorder %s19, 1
      %p106 = por %p104, %p105
      %p108 = scmp.ne.s32.totalorder %s91, %s107
      %p109 = scmp.eq.s32.totalorder %s19, 0
      %p110 = por %p108, %p109
      %s111 = ssub.s32 %s20, %s32
      %p112 = scmp.eq.s32.totalorder %s111, 0
      %s114 = sadd.s32 %s113, 1
      %s115 = scalar_select %p112, %s113, %s114
      %p118 = pneg %p112
      %p119 = scmp.eq.s32.totalorder %s13, 1
      %p120 = por %p118, %p119
      %p121 = scmp.ne.s32.totalorder %s113, %s116
      %p122 = scmp.eq.s32.totalorder %s13, 0
      %p123 = por %p121, %p122
      %p124 = scmp.ne.s32.totalorder %s113, %s116
      %p125 = scmp.eq.s32.totalorder %s18, 1
      %p126 = por %p124, %p125
      %p127 = scmp.ne.s32.totalorder %s116, %s117
      %p128 = scmp.eq.s32.totalorder %s18, 0
      %p129 = por %p127, %p128
      %p130 = scmp.ne.s32.totalorder %s116, %s117
      %p131 = scmp.eq.s32.totalorder %s19, 1
      %p132 = por %p130, %p131
      %p134 = scmp.ne.s32.totalorder %s117, %s133
      %p135 = scmp.eq.s32.totalorder %s19, 0
      %p136 = por %p134, %p135
      %s137 = ssub.s32 %s20, %s32
      %s138 = ssub.s32 %s21, %s28
      %s139 = sor.u32 %s137, %s138
      %p140 = scmp.eq.s32.totalorder %s139, 0
      %s142 = sadd.s32 %s141, 1
      %s143 = scalar_select %p140, %s141, %s142
      %p146 = pneg %p140
      %p147 = scmp.eq.s32.totalorder %s13, 1
      %p148 = por %p146, %p147
      %p149 = scmp.ne.s32.totalorder %s141, %s144
      %p150 = scmp.eq.s32.totalorder %s13, 0
      %p151 = por %p149, %p150
      %p152 = scmp.ne.s32.totalorder %s141, %s144
      %p153 = scmp.eq.s32.totalorder %s18, 1
      %p154 = por %p152, %p153
      %p155 = scmp.ne.s32.totalorder %s144, %s145
      %p156 = scmp.eq.s32.totalorder %s18, 0
      %p157 = por %p155, %p156
      %p158 = scmp.ne.s32.totalorder %s144, %s145
      %p159 = scmp.eq.s32.totalorder %s19, 1
      %p160 = por %p158, %p159
      %p162 = scmp.ne.s32.totalorder %s145, %s161
      %p163 = scmp.eq.s32.totalorder %s19, 0
      %p164 = por %p162, %p163
      %p165 = scmp.le.s32.totalorder 1, %s13
      %p166 = scmp.lt.s32.totalorder %s13, 3
      %p167 = pnand %p165, %p166
      %p168 = pneg %p167
      // Predicated region
      $region9: #{projection_layer_forward.3} parent=5 // pred_check
        _
      $region10: #{projection_layer_forward.3} parent=5 // pred_check_branch
        %170 = sbr.rel (%p167) target = $region12
      $region11: #{projection_layer_forward.3} parent=5 // pred_region
        %s171 = ssub.s32 %s13, 1
        // Predicated region
        $region13: #{projection_layer_forward.3} parent=11 // pred_check
          %p172 = pneg %p51
        $region14: #{projection_layer_forward.3} parent=11 // pred_check_branch
          %174 = sbr.rel (%p172) target = $region16
        $region15: #{projection_layer_forward.3} parent=11 // pred_region
          %s175 = smul.u32 2, %s22
          %p176 = scmp.lt.s32.totalorder %s175, 1
          %s177 = scalar_select %p176, %s175, 1
          %s178 = smul.addr %s177, 4
          %s179 = scalar_lea.vmem %s0, %s178
          %s180 = smul.u32 2, %s22
        $region16: #{projection_layer_forward.3} parent=11 // pred_fallthru
          _
        // Predicated region
        $region17: #{projection_layer_forward.3} parent=11 // pred_check
          %p181 = pneg %p129
        $region18: #{projection_layer_forward.3} parent=11 // pred_check_branch
          %183 = sbr.rel (%p181) target = $region20
        $region19: #{projection_layer_forward.3} parent=11 // pred_region
          %s184 = smul.u32 2, %s22
          %p185 = scmp.lt.s32.totalorder %s184, 1
          %s186 = scalar_select %p185, %s184, 1
          %s187 = smul.addr %s186, 8
          %s188 = scalar_lea.vmem %s3, %s187
          %s189 = smul.u32 2, %s22
        $region20: #{projection_layer_forward.3} parent=11 // pred_fallthru
          _
      $region12: #{projection_layer_forward.3} parent=5 // pred_fallthru
        _
      %p190 = scmp.lt.s32.totalorder %s13, 2
      // Predicated region
      $region21: #{projection_layer_forward.3} parent=5 // pred_check
        %p191 = pneg %p190
      $region22: #{projection_layer_forward.3} parent=5 // pred_check_branch
        %193 = sbr.rel (%p191) target = $region24
      $region23: #{projection_layer_forward.3} parent=5 // pred_region
        // Predicated region
        $region25: #{projection_layer_forward.3} parent=23 // pred_check
          %p194 = pneg %p71
        $region26: #{projection_layer_forward.3} parent=23 // pred_check_branch
          %196 = sbr.rel (%p194) target = $region28
        $region27: #{projection_layer_forward.3} parent=23 // pred_region
          %s197 = sand.u32 %s61, 1
          %s198 = sand.u32 %s61, 1
          %s199 = smul.addr %s198, 16
          %s200 = scalar_lea.vmem [#allocation2], %s199
          %s201 = smul.addr %s21, 4
          %s202 = scalar_lea.vmem %s1, %s201
          // Predicated region
          $region29: #{projection_layer_forward.3} parent=27 // pred_check
            _
          $region30: #{projection_layer_forward.3} parent=27 // pred_check_branch
            %204 = sbr.rel (0) target = $region32
          $region31: #{projection_layer_forward.3} parent=27 // pred_region
            // Predicated region
            $region33: #{projection_layer_forward.3} parent=31 // pred_check
              _
            $region34: #{projection_layer_forward.3} parent=31 // pred_check_branch
              %206 = sbr.rel target = $region36
            $region35: #{projection_layer_forward.3} parent=31 // pred_region
              // Predicated region
              $region48: #{projection_layer_forward.3} parent=35 // pred_check
                _
              $region49: #{projection_layer_forward.3} parent=35 // pred_check_branch
                %228 = sbr.rel (0) target = $region51
              $region50: #{projection_layer_forward.3} parent=35 // pred_region
                loop: start=0, step=1, limit=1
                $region52: #{projection_layer_forward.3} parent=50 // loop_pre_header
                  _
                $region53: #{projection_layer_forward.3} parent=50 // loop_header
                  %s230 = sphi 0, %s234
                  %p231 = scmp.ge.s32.totalorder %s230, 1
                  %s235 = sphi %s202, %s202
                  %s236 = sphi %s200, %s200
                $region54: #{projection_layer_forward.3} parent=50 // loop_header_branch
                  %233 = sbr.rel (%p231) target = $region58
                $region55: #{projection_layer_forward.3} parent=50 // loop_body
                  _
                $region56: #{projection_layer_forward.3} parent=50 // loop_footer
                  %s234 = sadd.s32 1, %s230
                $region57: #{projection_layer_forward.3} parent=50 // loop_footer_branch
                  %229 = sbr.rel target = $region53
                $region58: #{projection_layer_forward.3} parent=50 // loop_exit
                  _
                %s238 = ssub.s32 16, 1
                loop: start=0, step=1, limit=1
                $region59: #{projection_layer_forward.3} parent=50 // loop_pre_header
                  _
                $region60: #{projection_layer_forward.3} parent=50 // loop_header
                  %s240 = sphi 0, %s244
                  %p241 = scmp.ge.s32.totalorder %s240, 1
                  %s245 = sphi %s202, %s202
                  %s246 = sphi %s200, %s200
                $region61: #{projection_layer_forward.3} parent=50 // loop_header_branch
                  %243 = sbr.rel (%p241) target = $region65
                $region62: #{projection_layer_forward.3} parent=50 // loop_body
                  %v247 = vld [vmem:[%s245] sm:%s238]
                  %248 = vst [vmem:[%s246] sm:%s238] %v247
                  %v249 = vld [vmem:[%s245 + $0x8] sm:%s238]
                  %250 = vst [vmem:[%s246 + $0x4] sm:%s238] %v249
                  %v251 = vld [vmem:[%s245 + $0x10] sm:%s238]
                  %252 = vst [vmem:[%s246 + $0x8] sm:%s238] %v251
                  %v253 = vld [vmem:[%s245 + $0x18] sm:%s238]
                  %254 = vst [vmem:[%s246 + $0xc] sm:%s238] %v253
                $region63: #{projection_layer_forward.3} parent=50 // loop_footer
                  %s244 = sadd.s32 1, %s240
                $region64: #{projection_layer_forward.3} parent=50 // loop_footer_branch
                  %239 = sbr.rel target = $region60
                $region65: #{projection_layer_forward.3} parent=50 // loop_exit
                  _
              $region51: #{projection_layer_forward.3} parent=35 // pred_fallthru
                _
            $region36: #{projection_layer_forward.3} parent=31 // pred_fallthru
              _
            // Predicated region
            $region37: #{projection_layer_forward.3} parent=31 // pred_check
              _
            $region38: #{projection_layer_forward.3} parent=31 // pred_check_branch
              %208 = sbr.rel (0) target = $region40
            $region39: #{projection_layer_forward.3} parent=31 // pred_region
              %s210 = ssub.s32 16, 1
              loop: start=0, step=1, limit=1
              $region41: #{projection_layer_forward.3} parent=39 // loop_pre_header
                _
              $region42: #{projection_layer_forward.3} parent=39 // loop_header
                %s212 = sphi 0, %s216
                %p213 = scmp.ge.s32.totalorder %s212, 1
                %s217 = sphi %s202, %s202
                %s218 = sphi %s200, %s200
              $region43: #{projection_layer_forward.3} parent=39 // loop_header_branch
                %215 = sbr.rel (%p213) target = $region47
              $region44: #{projection_layer_forward.3} parent=39 // loop_body
                %v219 = vld [vmem:[%s217] sm:%s210]
                %220 = vst [vmem:[%s218] sm:%s210] %v219
                %v221 = vld [vmem:[%s217 + $0x8] sm:%s210]
                %222 = vst [vmem:[%s218 + $0x4] sm:%s210] %v221
                %v223 = vld [vmem:[%s217 + $0x10] sm:%s210]
                %224 = vst [vmem:[%s218 + $0x8] sm:%s210] %v223
                %v225 = vld [vmem:[%s217 + $0x18] sm:%s210]
                %226 = vst [vmem:[%s218 + $0xc] sm:%s210] %v225
              $region45: #{projection_layer_forward.3} parent=39 // loop_footer
                %s216 = sadd.s32 1, %s212
              $region46: #{projection_layer_forward.3} parent=39 // loop_footer_branch
                %211 = sbr.rel target = $region42
              $region47: #{projection_layer_forward.3} parent=39 // loop_exit
                _
            $region40: #{projection_layer_forward.3} parent=31 // pred_fallthru
              _
          $region32: #{projection_layer_forward.3} parent=27 // pred_fallthru
            _
          %255 = vnop
        $region28: #{projection_layer_forward.3} parent=23 // pred_fallthru
          _
        // Predicated region
        $region66: #{projection_layer_forward.3} parent=23 // pred_check
          %p256 = pneg %p97
        $region67: #{projection_layer_forward.3} parent=23 // pred_check_branch
          %258 = sbr.rel (%p256) target = $region69
        $region68: #{projection_layer_forward.3} parent=23 // pred_region
          %p259 = scmp.lt.s32.totalorder %s21, 1
          %s260 = scalar_select %p259, %s21, 1
          %s261 = scalar_lea.vmem %s2, %s260
        $region69: #{projection_layer_forward.3} parent=23 // pred_fallthru
          _
      $region24: #{projection_layer_forward.3} parent=5 // pred_fallthru
        _
      %p262 = scmp.le.s32.totalorder 1, %s13
      %p263 = scmp.lt.s32.totalorder %s13, 3
      %p264 = pnand %p262, %p263
      %p265 = pneg %p264
      // Predicated region
      $region70: #{projection_layer_forward.3} parent=5 // pred_check
        _
      $region71: #{projection_layer_forward.3} parent=5 // pred_check_branch
        %267 = sbr.rel (%p264) target = $region73
      $region72: #{projection_layer_forward.3} parent=5 // pred_region
        %s268 = ssub.s32 %s13, 1
        %s269 = sand.u32 %s64, 1
        %s270 = sand.u32 %s64, 1
        %s271 = smul.addr %s270, 16
        %s272 = scalar_lea.vmem [#allocation2], %s271
        // Predicated region
        $region74: #{projection_layer_forward.3} parent=72 // pred_check
          %p273 = pneg %p77
        $region75: #{projection_layer_forward.3} parent=72 // pred_check_branch
          %275 = sbr.rel (%p273) target = $region77
        $region76: #{projection_layer_forward.3} parent=72 // pred_region
          _
        $region77: #{projection_layer_forward.3} parent=72 // pred_fallthru
          _
        %s276 = smul.u32 2, %s22
        %p277 = scmp.lt.s32.totalorder %s276, 1
        %s278 = scalar_select %p277, %s276, 1
        %s279 = smul.addr %s278, 4
        %s280 = scalar_lea.vmem %s0, %s279
        %p281 = pneg %p51
        %p282 = pneg %p48
        %s283 = sand.u32 %s64, 1
        %s284 = sand.u32 %s64, 1
        %s285 = smul.addr %s284, 16
        %s286 = scalar_lea.vmem [#allocation2], %s285
        %p287 = pneg %p77
        %p288 = pneg %p74
        %p289 = scmp.lt.s32.totalorder %s23, 1
        %s290 = scalar_select %p289, %s23, 1
        %s291 = scalar_lea.vmem %s2, %s290
        %p292 = pneg %p103
        %p293 = pneg %p100
        %s294 = smul.u32 2, %s22
        %p295 = scmp.lt.s32.totalorder %s294, 1
        %s296 = scalar_select %p295, %s294, 1
        %s297 = smul.addr %s296, 8
        %s298 = scalar_lea.vmem %s3, %s297
        %p299 = pneg %p129
        %p300 = pneg %p126
        %p301 = pneg %p157
        %p302 = pneg %p154
        %s303 = sand.u32 %s144, 1
        %s304 = scalar_lea.sflag [#allocation4], %s303
        %s305 = sand.u32 %s144, 1
        %s306 = smul.addr %s305, 16
        %s307 = scalar_lea.vmem [#allocation3], %s306
        %s308 = smul.u32 2, %s22
        %p309 = scmp.lt.s32.totalorder %s308, 1
        %s310 = scalar_select %p309, %s308, 1
        %s311 = smul.addr %s310, 4
        %s312 = scalar_lea.vmem %s0, %s311
        %s313 = smul.u32 2, %s22
        %p314 = scmp.lt.s32.totalorder %s23, 1
        %s315 = scalar_select %p314, %s23, 1
        %s316 = scalar_lea.vmem %s2, %s315
        %s317 = smul.u32 2, %s22
        %p318 = scmp.lt.s32.totalorder %s317, 1
        %s319 = scalar_select %p318, %s317, 1
        %s320 = smul.addr %s319, 8
        %s321 = scalar_lea.vmem %s3, %s320
        %s322 = smul.u32 2, %s22
        %s323 = smul.u32 2, %s22
        %v325 = vld [vmem:[%s312] sm:$0xf]
        %v326 = vld [vmem:[%s312 + $0x4] sm:$0xf]
        %v327 = vld [vmem:[%s272] sm:$0xf]
        %v328 = vld [vmem:[%s272 + $0x4] sm:$0xf]
        %v329 = vld [vmem:[%s272 + $0x8] sm:$0xf]
        %v330 = vld [vmem:[%s272 + $0xc] sm:$0xf]
        %v331 = vld [vmem:[%s316] sm:$0x1]
        %v333 = vperm.slane %v331, 0
        %v337 = vunpack.c.l.b16 %v325
        %v338 = vunpack.c.l.b16 %v326
        %v339 = vpack.c.b16 %v338, %v337
        %v344 = vunpack.c.l.b16 %v327
        %v345 = vunpack.c.l.b16 %v328
        %v346 = vunpack.c.l.b16 %v329
        %v347 = vunpack.c.l.b16 %v330
        %v348 = vpack.c.b16 %v345, %v344
        %v349 = vpack.c.b16 %v347, %v346
        %vm352 = vcmask 261120
        %v354 = vsel %vm352, %v339, 0
        %356 = vmatpush.bf16.msra.mxu0 0
        %357 = vmatpush.bf16.msra.mxu0 0
        %358 = vmatpush.bf16.msra.mxu0 0
        %359 = vmatpush.bf16.msra.mxu0 0
        %360 = vmatpush.bf16.msra.mxu0 0
        %361 = vmatpush.bf16.msra.mxu0 0
        %362 = vmatpush.bf16.msra.mxu0 %v349
        %363 = vmatpush.bf16.msra.mxu0 %v348
        %364 = vmatmul.bf16.gmra.mxu0 %v354
        %v365 = vpop.f32.mrf.mxu0
        %v366 = vadd.f32 %v333, %v365
        %v367 = vpop.f32.mrf.mxu0
        %v368 = vadd.f32 %v333, %v367
        %369 = vdwg.mxu0
        %v370 = vld [vmem:[%s321] sm:$0xff]
        %v371 = vld [vmem:[%s321 + $0x8] sm:$0xff]
        %373 = vset.pattern.permute.xlu0 0
        %374 = vperm.xlu0 %373, %v370
        %v375 = vpop.permute.xlu0 %374
        %378 = vset.pattern.permute.xlu0 0
        %379 = vperm.xlu0 %378, %v371
        %v380 = vpop.permute.xlu0 %379
        %v382 = vsub.f32 %v366, %v375
        %v383 = vsub.f32 %v368, %v380
        %384 = vst [vmem:[%s307] sm:$0xff] %v382
        %385 = vst [vmem:[%s307 + $0x8] sm:$0xff] %v383
        %s386 = sand.u32 %s144, 1
        %s387 = scalar_lea.sflag [#allocation4], %s386
        %s388 = sand.u32 %s144, 1
        %s389 = smul.addr %s388, 16
        %s390 = scalar_lea.vmem [#allocation3], %s389
        // Predicated region
        $region78: #{projection_layer_forward.3} parent=72 // pred_check
          %p391 = pneg %p154
        $region79: #{projection_layer_forward.3} parent=72 // pred_check_branch
          %393 = sbr.rel (%p391) target = $region81
        $region80: #{projection_layer_forward.3} parent=72 // pred_region
          %s394 = smul.u32 2, %s22
          %396 = vsyncadd %s387, 0
          %s397 = smul.addr %s394, 2
          %s398 = sadd.s32 %s23, %s397
          %s399 = smul.addr %s398, 8
          %s400 = scalar_lea.hbm %s4, %s399
          %s401 = sshll.u32 %s390, 4
          %s402 = int_to_ptr.vmem [resolvable:$true] %s401
          %s403 = sshll.u32 %s400, 4
          %s404 = int_to_ptr.hbm [resolvable:$true] %s403
          %409 = dma.vmem_to_hbm [thread:$0]  %s402, 256, %s404, %s387, 128, 256, 8
        $region81: #{projection_layer_forward.3} parent=72 // pred_fallthru
          _
      $region73: #{projection_layer_forward.3} parent=5 // pred_fallthru
        _
      %p410 = scmp.le.s32.totalorder 2, %s13
      // Predicated region
      $region82: #{projection_layer_forward.3} parent=5 // pred_check
        %p411 = pneg %p410
      $region83: #{projection_layer_forward.3} parent=5 // pred_check_branch
        %413 = sbr.rel (%p411) target = $region85
      $region84: #{projection_layer_forward.3} parent=5 // pred_region
        %s414 = ssub.s32 %s13, 2
        // Predicated region
        $region86: #{projection_layer_forward.3} parent=84 // pred_check
          %p415 = pneg %p160
        $region87: #{projection_layer_forward.3} parent=84 // pred_check_branch
          %417 = sbr.rel (%p415) target = $region89
        $region88: #{projection_layer_forward.3} parent=84 // pred_region
          %s418 = sand.u32 %s145, 1
          %s419 = scalar_lea.sflag [#allocation4], %s418
          %s420 = sand.u32 %s145, 1
          %s421 = smul.addr %s420, 16
          %s422 = scalar_lea.vmem [#allocation3], %s421
          %424 = dma.done %s419, 256
        $region89: #{projection_layer_forward.3} parent=84 // pred_fallthru
          _
      $region85: #{projection_layer_forward.3} parent=5 // pred_fallthru
        _
    $region6: #{projection_layer_forward.3} parent=1 // loop_footer
      %s17 = sadd.s32 1, %s13
    $region7: #{projection_layer_forward.3} parent=1 // loop_footer_branch
      %12 = sbr.rel target = $region3
    $region8: #{projection_layer_forward.3} parent=1 // loop_exit
      _
    %425 = vsyncpa [#allocation4], 1
    %s426 = scalar_lea.sflag [#allocation4], 1
    %427 = vsyncpa %s426, 1

// kernel: projection_layer_forward.2
$region0: #{projection_layer_forward.2}
  #allocation0 [shape = 'u32[]', space=smem, size = 0x4, offset = 0x4, fixed_abs, tag = 'smem constant byte address 0x4 - core index']
  #allocation1 [shape = 'u32[72,128]{1,0:T(1,128)}', space=vmem, size = 0x9000, scoped, tag = 'internal scratch']
  #allocation2 [shape = 'f32[16,1]{1,0:T(8,128)}', space=vmem, size = 0x2000, scoped, tag = 'scratch operand']
  #allocation3 [shape = 'f32[16,1]{1,0:T(8,128)}', space=vmem, size = 0x2000, scoped, tag = 'scratch operand']
  %s0 = inlined_call_operand.vmem [shape: bf16[16,32], index: 0, kind: input, shape index: {}]
  %s1 = inlined_call_operand.vmem [shape: bf16[32,256], index: 1, kind: input, shape index: {}]
  %s2 = inlined_call_operand.vmem [shape: f32[1,256], index: 2, kind: input, shape index: {}]
  %s3 = inlined_call_operand.vmem [shape: f32[16,1], index: 3, kind: output, shape index: {}]
  %s4 = sld [smem:[#allocation0]]
  $region94: #{projection_layer_forward.2} parent=0
    _
  %s6 = ssub.s32 1, %s4
  %s7 = scalar_select 0, %s6, %s4
  $region1: #{projection_layer_forward.2} parent=0
    #allocation4 [shape = 'u8[16384]{0}', space=vmem, size = 0x4000, scoped, tag = 'input window, operand 1']
    loop: start=0, step=1, limit=4
    $region2: #{projection_layer_forward.2} parent=1 // loop_pre_header
      _
    $region3: #{projection_layer_forward.2} parent=1 // loop_header
      %s9 = sphi 0, %s13
      %p10 = scmp.ge.s32.totalorder %s9, 4
      %s16 = sphi 0, %s28
      %s17 = sphi 0, %s24
      %s18 = sphi 0, %s16
      %s19 = sphi 0, %s17
      %s20 = sphi 0, %s18
      %s21 = sphi 0, %s19
      %s31 = sphi 0, %s33
      %s34 = sphi 0, %s31
      %s35 = sphi 0, %s34
      %s51 = sphi 0, %s35
      %s57 = sphi 0, %s59
      %s60 = sphi 0, %s57
      %s61 = sphi 0, %s60
      %s77 = sphi 0, %s61
      %s83 = sphi 0, %s85
      %s86 = sphi 0, %s83
      %s87 = sphi 0, %s86
      %s103 = sphi 0, %s87
      %s109 = sphi 0, %s111
      %s112 = sphi 0, %s109
      %s113 = sphi 0, %s112
      %s129 = sphi 0, %s113
    $region4: #{projection_layer_forward.2} parent=1 // loop_header_branch
      %12 = sbr.rel (%p10) target = $region8
    $region5: #{projection_layer_forward.2} parent=1 // loop_body
      %s14 = ssub.s32 %s9, 1
      %s15 = ssub.s32 %s9, 2
      %s22 = sadd.s32 1, %s17
      %p23 = scmp.ge.s32.totalorder %s22, 2
      %s24 = scalar_select %p23, 0, %s22
      %s25 = sadd.s32 1, %s16
      %s26 = scalar_select %p23, %s25, %s16
      %p27 = scmp.ge.s32.totalorder %s26, 1
      %s28 = scalar_select %p27, 0, %s26
      %s29 = ssub.s32 %s16, %s28
      %p30 = scmp.eq.s32.totalorder %s29, 0
      %s32 = sadd.s32 %s31, 1
      %s33 = scalar_select %p30, %s31, %s32
      %p36 = pneg %p30
      %p37 = scmp.eq.s32.totalorder %s9, 1
      %p38 = por %p36, %p37
      %p39 = scmp.ne.s32.totalorder %s31, %s34
      %p40 = scmp.eq.s32.totalorder %s9, 0
      %p41 = por %p39, %p40
      %p42 = scmp.ne.s32.totalorder %s31, %s34
      %p43 = scmp.eq.s32.totalorder %s14, 1
      %p44 = por %p42, %p43
      %p45 = scmp.ne.s32.totalorder %s34, %s35
      %p46 = scmp.eq.s32.totalorder %s14, 0
      %p47 = por %p45, %p46
      %p48 = scmp.ne.s32.totalorder %s34, %s35
      %p49 = scmp.eq.s32.totalorder %s15, 1
      %p50 = por %p48, %p49
      %p52 = scmp.ne.s32.totalorder %s35, %s51
      %p53 = scmp.eq.s32.totalorder %s15, 0
      %p54 = por %p52, %p53
      %s55 = ssub.s32 %s17, %s24
      %p56 = scmp.eq.s32.totalorder %s55, 0
      %s58 = sadd.s32 %s57, 1
      %s59 = scalar_select %p56, %s57, %s58
      %p62 = pneg %p56
      %p63 = scmp.eq.s32.totalorder %s9, 1
      %p64 = por %p62, %p63
      %p65 = scmp.ne.s32.totalorder %s57, %s60
      %p66 = scmp.eq.s32.totalorder %s9, 0
      %p67 = por %p65, %p66
      %p68 = scmp.ne.s32.totalorder %s57, %s60
      %p69 = scmp.eq.s32.totalorder %s14, 1
      %p70 = por %p68, %p69
      %p71 = scmp.ne.s32.totalorder %s60, %s61
      %p72 = scmp.eq.s32.totalorder %s14, 0
      %p73 = por %p71, %p72
      %p74 = scmp.ne.s32.totalorder %s60, %s61
      %p75 = scmp.eq.s32.totalorder %s15, 1
      %p76 = por %p74, %p75
      %p78 = scmp.ne.s32.totalorder %s61, %s77
      %p79 = scmp.eq.s32.totalorder %s15, 0
      %p80 = por %p78, %p79
      %s81 = ssub.s32 %s17, %s24
      %p82 = scmp.eq.s32.totalorder %s81, 0
      %s84 = sadd.s32 %s83, 1
      %s85 = scalar_select %p82, %s83, %s84
      %p88 = pneg %p82
      %p89 = scmp.eq.s32.totalorder %s9, 1
      %p90 = por %p88, %p89
      %p91 = scmp.ne.s32.totalorder %s83, %s86
      %p92 = scmp.eq.s32.totalorder %s9, 0
      %p93 = por %p91, %p92
      %p94 = scmp.ne.s32.totalorder %s83, %s86
      %p95 = scmp.eq.s32.totalorder %s14, 1
      %p96 = por %p94, %p95
      %p97 = scmp.ne.s32.totalorder %s86, %s87
      %p98 = scmp.eq.s32.totalorder %s14, 0
      %p99 = por %p97, %p98
      %p100 = scmp.ne.s32.totalorder %s86, %s87
      %p101 = scmp.eq.s32.totalorder %s15, 1
      %p102 = por %p100, %p101
      %p104 = scmp.ne.s32.totalorder %s87, %s103
      %p105 = scmp.eq.s32.totalorder %s15, 0
      %p106 = por %p104, %p105
      %s107 = ssub.s32 %s16, %s28
      %p108 = scmp.eq.s32.totalorder %s107, 0
      %s110 = sadd.s32 %s109, 1
      %s111 = scalar_select %p108, %s109, %s110
      %p114 = pneg %p108
      %p115 = scmp.eq.s32.totalorder %s9, 1
      %p116 = por %p114, %p115
      %p117 = scmp.ne.s32.totalorder %s109, %s112
      %p118 = scmp.eq.s32.totalorder %s9, 0
      %p119 = por %p117, %p118
      %p120 = scmp.ne.s32.totalorder %s109, %s112
      %p121 = scmp.eq.s32.totalorder %s14, 1
      %p122 = por %p120, %p121
      %p123 = scmp.ne.s32.totalorder %s112, %s113
      %p124 = scmp.eq.s32.totalorder %s14, 0
      %p125 = por %p123, %p124
      %p126 = scmp.ne.s32.totalorder %s112, %s113
      %p127 = scmp.eq.s32.totalorder %s15, 1
      %p128 = por %p126, %p127
      %p130 = scmp.ne.s32.totalorder %s113, %s129
      %p131 = scmp.eq.s32.totalorder %s15, 0
      %p132 = por %p130, %p131
      %p133 = scmp.le.s32.totalorder 1, %s9
      %p134 = scmp.lt.s32.totalorder %s9, 3
      %p135 = pnand %p133, %p134
      %p136 = pneg %p135
      // Predicated region
      $region9: #{projection_layer_forward.2} parent=5 // pred_check
        _
      $region10: #{projection_layer_forward.2} parent=5 // pred_check_branch
        %138 = sbr.rel (%p135) target = $region12
      $region11: #{projection_layer_forward.2} parent=5 // pred_region
        %s139 = ssub.s32 %s9, 1
        // Predicated region
        $region13: #{projection_layer_forward.2} parent=11 // pred_check
          %p140 = pneg %p47
        $region14: #{projection_layer_forward.2} parent=11 // pred_check_branch
          %142 = sbr.rel (%p140) target = $region16
        $region15: #{projection_layer_forward.2} parent=11 // pred_region
          %s143 = smul.u32 2, %s18
          %p144 = scmp.lt.s32.totalorder %s143, 1
          %s145 = scalar_select %p144, %s143, 1
          %s146 = smul.addr %s145, 4
          %s147 = scalar_lea.vmem %s0, %s146
          %s148 = smul.u32 2, %s18
        $region16: #{projection_layer_forward.2} parent=11 // pred_fallthru
          _
      $region12: #{projection_layer_forward.2} parent=5 // pred_fallthru
        _
      %p149 = scmp.lt.s32.totalorder %s9, 2
      // Predicated region
      $region17: #{projection_layer_forward.2} parent=5 // pred_check
        %p150 = pneg %p149
      $region18: #{projection_layer_forward.2} parent=5 // pred_check_branch
        %152 = sbr.rel (%p150) target = $region20
      $region19: #{projection_layer_forward.2} parent=5 // pred_region
        // Predicated region
        $region21: #{projection_layer_forward.2} parent=19 // pred_check
          %p153 = pneg %p67
        $region22: #{projection_layer_forward.2} parent=19 // pred_check_branch
          %155 = sbr.rel (%p153) target = $region24
        $region23: #{projection_layer_forward.2} parent=19 // pred_region
          %s156 = sand.u32 %s57, 1
          %s157 = sand.u32 %s57, 1
          %s158 = smul.addr %s157, 16
          %s159 = scalar_lea.vmem [#allocation4], %s158
          %s160 = smul.addr %s17, 4
          %s161 = scalar_lea.vmem %s1, %s160
          // Predicated region
          $region25: #{projection_layer_forward.2} parent=23 // pred_check
            _
          $region26: #{projection_layer_forward.2} parent=23 // pred_check_branch
            %163 = sbr.rel (0) target = $region28
          $region27: #{projection_layer_forward.2} parent=23 // pred_region
            // Predicated region
            $region29: #{projection_layer_forward.2} parent=27 // pred_check
              _
            $region30: #{projection_layer_forward.2} parent=27 // pred_check_branch
              %165 = sbr.rel target = $region32
            $region31: #{projection_layer_forward.2} parent=27 // pred_region
              // Predicated region
              $region44: #{projection_layer_forward.2} parent=31 // pred_check
                _
              $region45: #{projection_layer_forward.2} parent=31 // pred_check_branch
                %187 = sbr.rel (0) target = $region47
              $region46: #{projection_layer_forward.2} parent=31 // pred_region
                loop: start=0, step=1, limit=1
                $region48: #{projection_layer_forward.2} parent=46 // loop_pre_header
                  _
                $region49: #{projection_layer_forward.2} parent=46 // loop_header
                  %s189 = sphi 0, %s193
                  %p190 = scmp.ge.s32.totalorder %s189, 1
                  %s194 = sphi %s161, %s161
                  %s195 = sphi %s159, %s159
                $region50: #{projection_layer_forward.2} parent=46 // loop_header_branch
                  %192 = sbr.rel (%p190) target = $region54
                $region51: #{projection_layer_forward.2} parent=46 // loop_body
                  _
                $region52: #{projection_layer_forward.2} parent=46 // loop_footer
                  %s193 = sadd.s32 1, %s189
                $region53: #{projection_layer_forward.2} parent=46 // loop_footer_branch
                  %188 = sbr.rel target = $region49
                $region54: #{projection_layer_forward.2} parent=46 // loop_exit
                  _
                %s197 = ssub.s32 16, 1
                loop: start=0, step=1, limit=1
                $region55: #{projection_layer_forward.2} parent=46 // loop_pre_header
                  _
                $region56: #{projection_layer_forward.2} parent=46 // loop_header
                  %s199 = sphi 0, %s203
                  %p200 = scmp.ge.s32.totalorder %s199, 1
                  %s204 = sphi %s161, %s161
                  %s205 = sphi %s159, %s159
                $region57: #{projection_layer_forward.2} parent=46 // loop_header_branch
                  %202 = sbr.rel (%p200) target = $region61
                $region58: #{projection_layer_forward.2} parent=46 // loop_body
                  %v206 = vld [vmem:[%s204] sm:%s197]
                  %207 = vst [vmem:[%s205] sm:%s197] %v206
                  %v208 = vld [vmem:[%s204 + $0x8] sm:%s197]
                  %209 = vst [vmem:[%s205 + $0x4] sm:%s197] %v208
                  %v210 = vld [vmem:[%s204 + $0x10] sm:%s197]
                  %211 = vst [vmem:[%s205 + $0x8] sm:%s197] %v210
                  %v212 = vld [vmem:[%s204 + $0x18] sm:%s197]
                  %213 = vst [vmem:[%s205 + $0xc] sm:%s197] %v212
                $region59: #{projection_layer_forward.2} parent=46 // loop_footer
                  %s203 = sadd.s32 1, %s199
                $region60: #{projection_layer_forward.2} parent=46 // loop_footer_branch
                  %198 = sbr.rel target = $region56
                $region61: #{projection_layer_forward.2} parent=46 // loop_exit
                  _
              $region47: #{projection_layer_forward.2} parent=31 // pred_fallthru
                _
            $region32: #{projection_layer_forward.2} parent=27 // pred_fallthru
              _
            // Predicated region
            $region33: #{projection_layer_forward.2} parent=27 // pred_check
              _
            $region34: #{projection_layer_forward.2} parent=27 // pred_check_branch
              %167 = sbr.rel (0) target = $region36
            $region35: #{projection_layer_forward.2} parent=27 // pred_region
              %s169 = ssub.s32 16, 1
              loop: start=0, step=1, limit=1
              $region37: #{projection_layer_forward.2} parent=35 // loop_pre_header
                _
              $region38: #{projection_layer_forward.2} parent=35 // loop_header
                %s171 = sphi 0, %s175
                %p172 = scmp.ge.s32.totalorder %s171, 1
                %s176 = sphi %s161, %s161
                %s177 = sphi %s159, %s159
              $region39: #{projection_layer_forward.2} parent=35 // loop_header_branch
                %174 = sbr.rel (%p172) target = $region43
              $region40: #{projection_layer_forward.2} parent=35 // loop_body
                %v178 = vld [vmem:[%s176] sm:%s169]
                %179 = vst [vmem:[%s177] sm:%s169] %v178
                %v180 = vld [vmem:[%s176 + $0x8] sm:%s169]
                %181 = vst [vmem:[%s177 + $0x4] sm:%s169] %v180
                %v182 = vld [vmem:[%s176 + $0x10] sm:%s169]
                %183 = vst [vmem:[%s177 + $0x8] sm:%s169] %v182
                %v184 = vld [vmem:[%s176 + $0x18] sm:%s169]
                %185 = vst [vmem:[%s177 + $0xc] sm:%s169] %v184
              $region41: #{projection_layer_forward.2} parent=35 // loop_footer
                %s175 = sadd.s32 1, %s171
              $region42: #{projection_layer_forward.2} parent=35 // loop_footer_branch
                %170 = sbr.rel target = $region38
              $region43: #{projection_layer_forward.2} parent=35 // loop_exit
                _
            $region36: #{projection_layer_forward.2} parent=27 // pred_fallthru
              _
          $region28: #{projection_layer_forward.2} parent=23 // pred_fallthru
            _
          %214 = vnop
        $region24: #{projection_layer_forward.2} parent=19 // pred_fallthru
          _
        // Predicated region
        $region62: #{projection_layer_forward.2} parent=19 // pred_check
          %p215 = pneg %p93
        $region63: #{projection_layer_forward.2} parent=19 // pred_check_branch
          %217 = sbr.rel (%p215) target = $region65
        $region64: #{projection_layer_forward.2} parent=19 // pred_region
          %p218 = scmp.lt.s32.totalorder %s17, 1
          %s219 = scalar_select %p218, %s17, 1
          %s220 = scalar_lea.vmem %s2, %s219
        $region65: #{projection_layer_forward.2} parent=19 // pred_fallthru
          _
      $region20: #{projection_layer_forward.2} parent=5 // pred_fallthru
        _
      %p221 = scmp.le.s32.totalorder 1, %s9
      %p222 = scmp.lt.s32.totalorder %s9, 3
      %p223 = pnand %p221, %p222
      %p224 = pneg %p223
      // Predicated region
      $region66: #{projection_layer_forward.2} parent=5 // pred_check
        _
      $region67: #{projection_layer_forward.2} parent=5 // pred_check_branch
        %226 = sbr.rel (%p223) target = $region69
      $region68: #{projection_layer_forward.2} parent=5 // pred_region
        %s227 = ssub.s32 %s9, 1
        %s228 = sand.u32 %s60, 1
        %s229 = sand.u32 %s60, 1
        %s230 = smul.addr %s229, 16
        %s231 = scalar_lea.vmem [#allocation4], %s230
        // Predicated region
        $region70: #{projection_layer_forward.2} parent=68 // pred_check
          %p232 = pneg %p73
        $region71: #{projection_layer_forward.2} parent=68 // pred_check_branch
          %234 = sbr.rel (%p232) target = $region73
        $region72: #{projection_layer_forward.2} parent=68 // pred_region
          _
        $region73: #{projection_layer_forward.2} parent=68 // pred_fallthru
          _
        %s235 = smul.u32 2, %s18
        %p236 = scmp.lt.s32.totalorder %s235, 1
        %s237 = scalar_select %p236, %s235, 1
        %s238 = smul.addr %s237, 4
        %s239 = scalar_lea.vmem %s0, %s238
        %p240 = pneg %p47
        %p241 = pneg %p44
        %s242 = sand.u32 %s60, 1
        %s243 = sand.u32 %s60, 1
        %s244 = smul.addr %s243, 16
        %s245 = scalar_lea.vmem [#allocation4], %s244
        %p246 = pneg %p73
        %p247 = pneg %p70
        %p248 = scmp.lt.s32.totalorder %s19, 1
        %s249 = scalar_select %p248, %s19, 1
        %s250 = scalar_lea.vmem %s2, %s249
        %p251 = pneg %p99
        %p252 = pneg %p96
        %p253 = pneg %p125
        %p254 = pneg %p122
        %s255 = smul.u32 2, %s18
        %p256 = scmp.lt.s32.totalorder %s255, 1
        %s257 = scalar_select %p256, %s255, 1
        %s258 = smul.addr %s257, 8
        %s259 = scalar_lea.vmem %s3, %s258
        %s260 = smul.u32 2, %s18
        %p261 = scmp.lt.s32.totalorder %s260, 1
        %s262 = scalar_select %p261, %s260, 1
        %s263 = smul.addr %s262, 4
        %s264 = scalar_lea.vmem %s0, %s263
        %s265 = smul.u32 2, %s18
        %p266 = scmp.lt.s32.totalorder %s19, 1
        %s267 = scalar_select %p266, %s19, 1
        %s268 = scalar_lea.vmem %s2, %s267
        %s269 = smul.u32 2, %s18
        %p270 = scmp.lt.s32.totalorder %s269, 1
        %s271 = scalar_select %p270, %s269, 1
        %s272 = smul.addr %s271, 8
        %s273 = scalar_lea.vmem %s3, %s272
        %s274 = smul.u32 2, %s18
        %p276 = scmp.eq.s32.totalorder %s19, 0
        // Predicated region
        $region74: #{projection_layer_forward.2} parent=68 // pred_check
          %p277 = pneg %p276
        $region75: #{projection_layer_forward.2} parent=68 // pred_check_branch
          %279 = sbr.rel (%p277) target = $region77
        $region76: #{projection_layer_forward.2} parent=68 // pred_region
          %vm280 = vcmask 7168
          %281 = vst.msk [vmem:[#allocation2] sm:$0xff] %vm280, -inf
          %282 = vst.msk [vmem:[#allocation2 + $0x8] sm:$0xff] %vm280, -inf
          %283 = vst.msk [vmem:[#allocation3] sm:$0xff] %vm280, 0.0
          %284 = vst.msk [vmem:[#allocation3 + $0x8] sm:$0xff] %vm280, 0.0
        $region77: #{projection_layer_forward.2} parent=68 // pred_fallthru
          _
        %v285 = vld [vmem:[%s264] sm:$0xf]
        %v286 = vld [vmem:[%s264 + $0x4] sm:$0xf]
        %v287 = vld [vmem:[%s231] sm:$0xf]
        %v288 = vld [vmem:[%s231 + $0x4] sm:$0xf]
        %v289 = vld [vmem:[%s231 + $0x8] sm:$0xf]
        %v290 = vld [vmem:[%s231 + $0xc] sm:$0xf]
        %v291 = vld [vmem:[%s268] sm:$0x1]
        %v293 = vperm.slane %v291, 0
        %v297 = vunpack.c.l.b16 %v285
        %v298 = vunpack.c.l.b16 %v286
        %v299 = vpack.c.b16 %v298, %v297
        %v304 = vunpack.c.l.b16 %v287
        %v305 = vunpack.c.l.b16 %v288
        %v306 = vunpack.c.l.b16 %v289
        %v307 = vunpack.c.l.b16 %v290
        %v308 = vpack.c.b16 %v305, %v304
        %v309 = vpack.c.b16 %v307, %v306
        %vm312 = vcmask 261120
        %v314 = vsel %vm312, %v299, 0
        %316 = vmatpush.bf16.msra.mxu0 0
        %317 = vmatpush.bf16.msra.mxu0 0
        %318 = vmatpush.bf16.msra.mxu0 0
        %319 = vmatpush.bf16.msra.mxu0 0
        %320 = vmatpush.bf16.msra.mxu0 0
        %321 = vmatpush.bf16.msra.mxu0 0
        %322 = vmatpush.bf16.msra.mxu0 %v309
        %323 = vmatpush.bf16.msra.mxu0 %v308
        %324 = vmatmul.bf16.gmra.mxu0 %v314
        %v325 = vpop.f32.mrf.mxu0
        %v326 = vadd.f32 %v293, %v325
        %v327 = vpop.f32.mrf.mxu0
        %v328 = vadd.f32 %v293, %v327
        %329 = vdwg.mxu0
        %v330 = vld [vmem:[#allocation2] sm:$0xff]
        %v331 = vld [vmem:[#allocation2 + $0x8] sm:$0xff]
        %332 = vmax.xlane.f32.xlu0 %v326
        %v333 = vpop.xlane.xlu0 %332
        %334 = vmax.xlane.f32.xlu0 %v328
        %v335 = vpop.xlane.xlu0 %334
        %v336 = vmax.f32 %v330, %v333
        %v337 = vmax.f32 %v331, %v335
        %v338 = vsub.f32 %v330, %v336
        %v339 = vsub.f32 %v331, %v337
        %v340 = vmul.f32 %v338, 1.442695
        %v341 = vpow.pop %v340
        %v342 = vmul.f32 %v339, 1.442695
        %v343 = vpow.pop %v342
        %v344 = vld [vmem:[#allocation3] sm:$0xff]
        %v345 = vld [vmem:[#allocation3 + $0x8] sm:$0xff]
        %v346 = vmul.f32 %v341, %v344
        %v347 = vmul.f32 %v343, %v345
        %349 = vset.pattern.permute.xlu0 0
        %350 = vperm.xlu0 %349, %v336
        %v351 = vpop.permute.xlu0 %350
        %354 = vset.pattern.permute.xlu0 0
        %355 = vperm.xlu0 %354, %v337
        %v356 = vpop.permute.xlu0 %355
        %v358 = vsub.f32 %v326, %v351
        %v359 = vsub.f32 %v328, %v356
        %v360 = vmul.f32 %v358, 1.442695
        %v361 = vpow.pop %v360
        %v362 = vmul.f32 %v359, 1.442695
        %v363 = vpow.pop %v362
        %364 = vadd.xlane.f32.xlu0 %v361
        %v365 = vpop.xlane.xlu0 %364
        %366 = vadd.xlane.f32.xlu0 %v363
        %v367 = vpop.xlane.xlu0 %366
        %v368 = vadd.f32 %v346, %v365
        %v369 = vadd.f32 %v347, %v367
        %vm370 = vcmask 7168
        %371 = vst.msk [vmem:[#allocation3] sm:$0xff] %vm370, %v368
        %372 = vst.msk [vmem:[#allocation3 + $0x8] sm:$0xff] %vm370, %v369
        %373 = vst.msk [vmem:[#allocation2] sm:$0xff] %vm370, %v336
        %374 = vst.msk [vmem:[#allocation2 + $0x8] sm:$0xff] %vm370, %v337
        %p375 = scmp.eq.s32.totalorder %s19, 1
        // Predicated region
        $region78: #{projection_layer_forward.2} parent=68 // pred_check
          %p376 = pneg %p375
        $region79: #{projection_layer_forward.2} parent=68 // pred_check_branch
          %378 = sbr.rel (%p376) target = $region81
        $region80: #{projection_layer_forward.2} parent=68 // pred_region
          %v379 = vld [vmem:[#allocation2] sm:$0xff]
          %v380 = vld [vmem:[#allocation2 + $0x8] sm:$0xff]
          %v381 = vld [vmem:[#allocation3] sm:$0xff]
          %v382 = vld [vmem:[#allocation3 + $0x8] sm:$0xff]
          %v383 = vlog2.pop %v381
          %v384 = vmul.f32 %v383, 0.6931472
          %v385 = vlog2.pop %v382
          %v386 = vmul.f32 %v385, 0.6931472
          %v387 = vadd.f32 %v379, %v384
          %v388 = vadd.f32 %v380, %v386
          %389 = vst.msk [vmem:[%s273] sm:$0xff] %vm370, %v387
          %390 = vst.msk [vmem:[%s273 + $0x8] sm:$0xff] %vm370, %v388
        $region81: #{projection_layer_forward.2} parent=68 // pred_fallthru
          _
        %s391 = smul.u32 2, %s18
        %p392 = scmp.lt.s32.totalorder %s391, 1
        %s393 = scalar_select %p392, %s391, 1
        %s394 = smul.addr %s393, 8
        %s395 = scalar_lea.vmem %s3, %s394
        // Predicated region
        $region82: #{projection_layer_forward.2} parent=68 // pred_check
          %p396 = pneg %p122
        $region83: #{projection_layer_forward.2} parent=68 // pred_check_branch
          %398 = sbr.rel (%p396) target = $region85
        $region84: #{projection_layer_forward.2} parent=68 // pred_region
          %s399 = smul.u32 2, %s18
        $region85: #{projection_layer_forward.2} parent=68 // pred_fallthru
          _
        // Predicated region
        $region86: #{projection_layer_forward.2} parent=68 // pred_check
          %p400 = pneg %p122
        $region87: #{projection_layer_forward.2} parent=68 // pred_check_branch
          %402 = sbr.rel (%p400) target = $region89
        $region88: #{projection_layer_forward.2} parent=68 // pred_region
          %s403 = smul.u32 2, %s18
          %p404 = scmp.lt.s32.totalorder %s403, 1
          %s405 = scalar_select %p404, %s403, 1
          %s406 = smul.addr %s405, 8
          %s407 = scalar_lea.vmem %s3, %s406
        $region89: #{projection_layer_forward.2} parent=68 // pred_fallthru
          _
      $region69: #{projection_layer_forward.2} parent=5 // pred_fallthru
        _
      %p408 = scmp.le.s32.totalorder 2, %s9
      // Predicated region
      $region90: #{projection_layer_forward.2} parent=5 // pred_check
        %p409 = pneg %p408
      $region91: #{projection_layer_forward.2} parent=5 // pred_check_branch
        %411 = sbr.rel (%p409) target = $region93
      $region92: #{projection_layer_forward.2} parent=5 // pred_region
        %s412 = ssub.s32 %s9, 2
      $region93: #{projection_layer_forward.2} parent=5 // pred_fallthru
        _
    $region6: #{projection_layer_forward.2} parent=1 // loop_footer
      %s13 = sadd.s32 1, %s9
    $region7: #{projection_layer_forward.2} parent=1 // loop_footer_branch
      %8 = sbr.rel target = $region3
    $region8: #{projection_layer_forward.2} parent=1 // loop_exit
      _

</llo_original>
